<compile_context>
chip_gen: v5e
topology: v5e:2x2
jax: 0.10.0
libtpu: 0.0.40
codegen_flags: <defaults>
</compile_context>

<pallas_src>
import jax
import jax.numpy as jnp
from jax.experimental import pallas as pl
from jax.experimental.pallas import tpu as pltpu


def _round_up(a, b):
    return (a + b - 1) // b * b


def _ffn_kernel(x_ref, w1_ref, b1_ref, w2_ref, b2_ref, o_ref, acc_ref):
    # x_ref:  (tm, d_model)      token tile (constant across the k axis)
    # w1_ref: (d_model, tk)      slab of first weight
    # b1_ref: (1, tk)            slab of first bias
    # w2_ref: (tk, d_model)      slab of second weight
    # b2_ref: (1, d_model)       second bias (constant across grid)
    # o_ref:  (tm, d_model)      output tile (resident across k)
    # acc_ref:(tm, d_model) f32  accumulator scratch
    k = pl.program_id(1)

    @pl.when(k == 0)
    def _init():
        # Fold the second bias into the accumulator init.
        acc_ref[...] = jnp.broadcast_to(
            b2_ref[...].astype(jnp.float32), acc_ref.shape)

    # First matmul slab: (tm, d_model) @ (d_model, tk) -> f32 (tm, tk)
    h = jnp.dot(x_ref[...], w1_ref[...], preferred_element_type=jnp.float32)
    h = h + b1_ref[...].astype(jnp.float32)
    h = jnp.maximum(h, 0.0)                      # ReLU in f32 (VPU)
    # Dropout: identity in eval/inference mode.
    # TODO(synk): training-mode dropout would need in-kernel PRNG + scaling.

    # Second matmul slab contracts this d_ff slab into the accumulator.
    acc_ref[...] += jnp.dot(h.astype(w2_ref.dtype), w2_ref[...],
                            preferred_element_type=jnp.float32)

    @pl.when(k == pl.num_programs(1) - 1)
    def _finalize():
        o_ref[...] = acc_ref[...].astype(o_ref.dtype)


def feed_forward(x, w1, b1, w2, b2, *, tm=256, tk=512,
                 vmem_cap_bytes=64 * 1024 * 1024):
    """x: [batch, seq, d_model] -> [batch, seq, d_model]."""
    batch, seq, d_model = x.shape
    d_ff = w1.shape[1]
    n = batch * seq

    x2d = x.reshape(n, d_model)

    # ---- pick TPU-friendly tile sizes and pad shapes -----------------------
    d_model_p = _round_up(d_model, 128)                 # lane-dense output
    tm_eff = _round_up(min(tm, _round_up(n, 8)), 8)     # sublane-aligned
    n_p = _round_up(n, tm_eff)
    d_ff_128 = _round_up(d_ff, 128)
    tk_eff = _round_up(min(tk, d_ff_128), 128)
    d_ff_p = _round_up(d_ff_128, tk_eff)

    x2d_p = jnp.pad(x2d, ((0, n_p - n), (0, d_model_p - d_model)))
    w1_p = jnp.pad(w1, ((0, d_model_p - d_model), (0, d_ff_p - d_ff)))
    b1_p = jnp.pad(b1.reshape(1, d_ff), ((0, 0), (0, d_ff_p - d_ff)))
    w2_p = jnp.pad(w2, ((0, d_ff_p - d_ff), (0, d_model_p - d_model)))
    b2_p = jnp.pad(b2.reshape(1, d_model), ((0, 0), (0, d_model_p - d_model)))

    grid = (n_p // tm_eff, d_ff_p // tk_eff)            # (tokens, reduction)

    # ---- explicit VMEM budget (double-buffered inputs/outputs + acc) -------
    itemsize = x2d_p.dtype.itemsize
    vmem_est = (
        2 * tm_eff * d_model_p * itemsize               # x tile
        + 2 * d_model_p * tk_eff * itemsize             # w1 slab
        + 2 * tk_eff * d_model_p * itemsize             # w2 slab
        + 2 * (tk_eff + d_model_p) * itemsize           # biases
        + 2 * tm_eff * d_model_p * itemsize             # output tile
        + tm_eff * d_model_p * 4                        # f32 accumulator
        + tm_eff * tk_eff * 4                           # f32 intermediate h
    )
    vmem_limit = int(min(max(vmem_est * 3 // 2, 32 * 1024 * 1024),
                         vmem_cap_bytes))

    cost = pl.CostEstimate(
        flops=2 * 2 * n_p * d_model_p * d_ff_p,
        transcendentals=0,
        bytes_accessed=(x2d_p.size + w1_p.size + w2_p.size
                        + n_p * d_model_p) * itemsize,
    )

    out2d = pl.pallas_call(
        _ffn_kernel,
        out_shape=jax.ShapeDtypeStruct((n_p, d_model_p), x.dtype),
        grid_spec=pltpu.PrefetchScalarGridSpec(
            num_scalar_prefetch=0,
            grid=grid,
            in_specs=[
                pl.BlockSpec((tm_eff, d_model_p), lambda i, k: (i, 0)),   # x
                pl.BlockSpec((d_model_p, tk_eff), lambda i, k: (0, k)),   # w1
                pl.BlockSpec((1, tk_eff), lambda i, k: (0, k)),           # b1
                pl.BlockSpec((tk_eff, d_model_p), lambda i, k: (k, 0)),   # w2
                pl.BlockSpec((1, d_model_p), lambda i, k: (0, 0)),        # b2
            ],
            out_specs=pl.BlockSpec((tm_eff, d_model_p), lambda i, k: (i, 0)),
            scratch_shapes=[pltpu.VMEM((tm_eff, d_model_p), jnp.float32)],
        ),
        compiler_params=pltpu.CompilerParams(
            dimension_semantics=("parallel", "arbitrary"),
            vmem_limit_bytes=vmem_limit,
        ),
        cost_estimate=cost,
    )(x2d_p, w1_p, b1_p, w2_p, b2_p)

    return out2d[:n, :d_model].reshape(batch, seq, d_model)


def init_params(key, d_model, d_ff, dtype=jnp.float32):
    """Deterministic init mirroring nn.Linear shapes (weights stored transposed)."""
    k1, k2, k3, k4 = jax.random.split(key, 4)
    lim1 = 1.0 / (d_model ** 0.5)
    lim2 = 1.0 / (d_ff ** 0.5)
    w1 = jax.random.uniform(k1, (d_model, d_ff), dtype, -lim1, lim1)
    b1 = jax.random.uniform(k2, (d_ff,), dtype, -lim1, lim1)
    w2 = jax.random.uniform(k3, (d_ff, d_model), dtype, -lim2, lim2)
    b2 = jax.random.uniform(k4, (d_model,), dtype, -lim2, lim2)
    return w1, b1, w2, b2


if __name__ == "__main__":
    key = jax.random.PRNGKey(0)

    def run_case(batch, seq, d_model, d_ff, case_key):
        kx, kp = jax.random.split(case_key)
        x = jax.random.normal(kx, (batch, seq, d_model), jnp.float32)
        w1, b1, w2, b2 = init_params(kp, d_model, d_ff)

        out = feed_forward(x, w1, b1, w2, b2)
        jax.block_until_ready(out)

        # reference check in plain JAX (eval-mode dropout == identity)
        ref = jnp.maximum(x @ w1 + b1, 0.0) @ w2 + b2
        assert out.shape == (batch, seq, d_model)
        assert jnp.allclose(out, ref, atol=2e-5, rtol=2e-5), "mismatch vs reference"

    k1, k2 = jax.random.split(key)
    run_case(2, 8, 32, 64, k1)     # small power-of-two dims
    run_case(2, 10, 48, 96, k2)    # odd dims -> exercises padding / tail path

    print("KERNEL_OK")
</pallas_src>

<mosaic_0001>
module attributes {stable_mosaic.version = 11 : i64} {
  func.func @_ffn_kernel(%arg0: i32, %arg1: i32, %arg2: memref<16x128xf32, #tpu.memory_space<vmem>>, %arg3: memref<128x128xf32, #tpu.memory_space<vmem>>, %arg4: memref<1x128xf32, #tpu.memory_space<vmem>>, %arg5: memref<128x128xf32, #tpu.memory_space<vmem>>, %arg6: memref<1x128xf32, #tpu.memory_space<vmem>>, %arg7: memref<16x128xf32, #tpu.memory_space<vmem>>, %arg8: memref<16x128xf32, #tpu.memory_space<vmem>>) attributes {dimension_semantics = [#tpu.dimension_semantics<parallel>, #tpu.dimension_semantics<arbitrary>], iteration_bounds = array<i64: 1, 1>, scalar_prefetch = 0 : i64, scratch_operands = 1 : i64, tpu.core_type = #tpu.core_type<tc>, window_params = [{transform_indices = @transform_0, window_bounds = array<i64: 16, 128>}, {transform_indices = @transform_1, window_bounds = array<i64: 128, 128>}, {transform_indices = @transform_2, window_bounds = array<i64: 1, 128>}, {transform_indices = @transform_3, window_bounds = array<i64: 128, 128>}, {pipeline_mode = #tpu.pipeline_mode<synchronous>, transform_indices = @transform_4, window_bounds = array<i64: 1, 128>}, {transform_indices = @transform_5, window_bounds = array<i64: 16, 128>}]} {
    %c0_i32 = arith.constant 0 : i32
    %0 = arith.cmpi eq, %arg1, %c0_i32 : i32
    %1 = arith.extui %0 : i1 to i32
    %c0_i32_0 = arith.constant 0 : i32
    %2 = arith.cmpi ne, %1, %c0_i32_0 : i32
    scf.if %2 {
      %c0_16 = arith.constant 0 : index
      %c0_17 = arith.constant 0 : index
      %19 = vector.load %arg6[%c0_16, %c0_17] : memref<1x128xf32, #tpu.memory_space<vmem>>, vector<1x128xf32>
      %20 = vector.shape_cast %19 : vector<1x128xf32> to vector<1x128xf32>
      %21 = vector.broadcast %20 : vector<1x128xf32> to vector<16x128xf32>
      %c0_18 = arith.constant 0 : index
      %c0_19 = arith.constant 0 : index
      %22 = vector.load %arg8[%c0_18, %c0_19] : memref<16x128xf32, #tpu.memory_space<vmem>>, vector<16x128xf32>
      tpu.vector_store %arg8[%c0_18, %c0_19], %21 {strides = array<i32>} : memref<16x128xf32, #tpu.memory_space<vmem>>, vector<16x128xf32>,
    } else {
    }
    %c0 = arith.constant 0 : index
    %c0_1 = arith.constant 0 : index
    %3 = vector.load %arg2[%c0, %c0_1] : memref<16x128xf32, #tpu.memory_space<vmem>>, vector<16x128xf32>
    %c0_2 = arith.constant 0 : index
    %c0_3 = arith.constant 0 : index
    %4 = vector.load %arg3[%c0_2, %c0_3] : memref<128x128xf32, #tpu.memory_space<vmem>>, vector<128x128xf32>
    %cst = arith.constant dense<0.000000e+00> : vector<16x128xf32>
    %5 = tpu.matmul %3, %4, %cst {dimension_numbers = #tpu.dot_dimension_numbers<[1], [0], [0], [1], [0, 0, 1, 1], [], []>} : vector<16x128xf32>, vector<128x128xf32>, vector<16x128xf32> -> vector<16x128xf32>
    %c0_4 = arith.constant 0 : index
    %c0_5 = arith.constant 0 : index
    %6 = vector.load %arg4[%c0_4, %c0_5] : memref<1x128xf32, #tpu.memory_space<vmem>>, vector<1x128xf32>
    %7 = vector.broadcast %6 : vector<1x128xf32> to vector<16x128xf32>
    %8 = arith.addf %5, %7 : vector<16x128xf32>
    %cst_6 = arith.constant 0.000000e+00 : f32
    %9 = vector.broadcast %cst_6 : f32 to vector<16x128xf32>
    %10 = arith.maximumf %8, %9 : vector<16x128xf32>
    %c0_7 = arith.constant 0 : index
    %c0_8 = arith.constant 0 : index
    %11 = vector.load %arg8[%c0_7, %c0_8] : memref<16x128xf32, #tpu.memory_space<vmem>>, vector<16x128xf32>
    %c0_9 = arith.constant 0 : index
    %c0_10 = arith.constant 0 : index
    %12 = vector.load %arg5[%c0_9, %c0_10] : memref<128x128xf32, #tpu.memory_space<vmem>>, vector<128x128xf32>
    %cst_11 = arith.constant dense<0.000000e+00> : vector<16x128xf32>
    %13 = tpu.matmul %10, %12, %cst_11 {dimension_numbers = #tpu.dot_dimension_numbers<[1], [0], [0], [1], [0, 0, 1, 1], [], []>} : vector<16x128xf32>, vector<128x128xf32>, vector<16x128xf32> -> vector<16x128xf32>
    %14 = arith.addf %11, %13 : vector<16x128xf32>
    %c0_12 = arith.constant 0 : index
    %c0_13 = arith.constant 0 : index
    %15 = vector.load %arg8[%c0_12, %c0_13] : memref<16x128xf32, #tpu.memory_space<vmem>>, vector<16x128xf32>
    tpu.vector_store %arg8[%c0_12, %c0_13], %14 {strides = array<i32>} : memref<16x128xf32, #tpu.memory_space<vmem>>, vector<16x128xf32>,
    %c0_i32_14 = arith.constant 0 : i32
    %16 = arith.cmpi eq, %arg1, %c0_i32_14 : i32
    %17 = arith.extui %16 : i1 to i32
    %c0_i32_15 = arith.constant 0 : i32
    %18 = arith.cmpi ne, %17, %c0_i32_15 : i32
    scf.if %18 {
      %c0_16 = arith.constant 0 : index
      %c0_17 = arith.constant 0 : index
      %19 = vector.load %arg8[%c0_16, %c0_17] : memref<16x128xf32, #tpu.memory_space<vmem>>, vector<16x128xf32>
      %c0_18 = arith.constant 0 : index
      %c0_19 = arith.constant 0 : index
      %20 = vector.load %arg7[%c0_18, %c0_19] : memref<16x128xf32, #tpu.memory_space<vmem>>, vector<16x128xf32>
      tpu.vector_store %arg7[%c0_18, %c0_19], %19 {strides = array<i32>} : memref<16x128xf32, #tpu.memory_space<vmem>>, vector<16x128xf32>,
    } else {
    }
    return
  }
  func.func @transform_0(%arg0: i32, %arg1: i32) -> (i32, i32) {
    %c0_i32 = arith.constant 0 : i32
    %c0_i32_0 = arith.constant 0 : i32
    return %arg0, %c0_i32 : i32, i32
  }
  func.func @transform_1(%arg0: i32, %arg1: i32) -> (i32, i32) {
    %c0_i32 = arith.constant 0 : i32
    %c0_i32_0 = arith.constant 0 : i32
    return %c0_i32, %arg1 : i32, i32
  }
  func.func @transform_2(%arg0: i32, %arg1: i32) -> (i32, i32) {
    %c0_i32 = arith.constant 0 : i32
    %c0_i32_0 = arith.constant 0 : i32
    return %c0_i32, %arg1 : i32, i32
  }
  func.func @transform_3(%arg0: i32, %arg1: i32) -> (i32, i32) {
    %c0_i32 = arith.constant 0 : i32
    %c0_i32_0 = arith.constant 0 : i32
    return %arg1, %c0_i32 : i32, i32
  }
  func.func @transform_4(%arg0: i32, %arg1: i32) -> (i32, i32) {
    %c0_i32 = arith.constant 0 : i32
    %c0_i32_0 = arith.constant 0 : i32
    %c0_i32_1 = arith.constant 0 : i32
    return %c0_i32, %c0_i32_0 : i32, i32
  }
  func.func @transform_5(%arg0: i32, %arg1: i32) -> (i32, i32) {
    %c0_i32 = arith.constant 0 : i32
    %c0_i32_0 = arith.constant 0 : i32
    return %arg0, %c0_i32 : i32, i32
  }
}

</mosaic_0001>

<llo_original>
// kernel: tpu_custom_call.1
$region0: #{tpu_custom_call.1}
  #allocation0 [shape = 'u32[]', space=smem, size = 0x4, offset = 0x4, fixed_abs, tag = 'smem constant byte address 0x4 - core index']
  #allocation1 [shape = 'u32[72,128]{1,0:T(1,128)}', space=vmem, size = 0x9000, scoped, tag = 'internal scratch']
  #allocation2 [shape = 'f32[16,128]{1,0:T(8,128)}', space=vmem, size = 0x2000, scoped, tag = 'scratch operand']
  %s0 = inlined_call_operand.hbm [shape: f32[16,128], index: 0, kind: input, shape index: {}]
  %s1 = inlined_call_operand.hbm [shape: f32[128,128], index: 1, kind: input, shape index: {}]
  %s2 = inlined_call_operand.vmem [shape: f32[1,128], index: 2, kind: input, shape index: {}]
  %s3 = inlined_call_operand.hbm [shape: f32[128,128], index: 3, kind: input, shape index: {}]
  %s4 = inlined_call_operand.vmem [shape: f32[1,128], index: 4, kind: input, shape index: {}]
  %s5 = inlined_call_operand.hbm [shape: f32[16,128], index: 5, kind: output, shape index: {}]
  %s6 = sld [smem:[#allocation0]]
  $region50: #{tpu_custom_call.1} parent=0
    _
  %s8 = ssub.s32 1, %s6
  %s9 = scalar_select 0, %s8, %s6
  $region1: #{tpu_custom_call.1} parent=0
    #allocation3 [shape = 'u8[8192]{0}', space=vmem, size = 0x2000, scoped, tag = 'input window, operand 0, single buffered']
    #allocation4 [shape = 's32[1]{0}', space=sflag, size = 0x4, scoped, tag = 'scoped memory for tpu_custom_call.1']
    #allocation5 [shape = 's32[1]{0}', space=sflag, size = 0x4, scoped, tag = 'scoped memory for tpu_custom_call.1']
    #allocation6 [shape = 'u8[65536]{0}', space=vmem, size = 0x10000, scoped, tag = 'input window, operand 1, single buffered']
    #allocation7 [shape = 's32[1]{0}', space=sflag, size = 0x4, scoped, tag = 'scoped memory for tpu_custom_call.1']
    #allocation8 [shape = 'u8[65536]{0}', space=vmem, size = 0x10000, scoped, tag = 'input window, operand 3, single buffered']
    #allocation9 [shape = 'u8[8192]{0}', space=vmem, size = 0x2000, scoped, tag = 'output window, operand 0, single buffered']
    %10 = vsyncpa [#allocation4], 0
    %11 = vsyncpa [#allocation7], 0
    %12 = vsyncpa [#allocation5], 0
    // Predicated region
    $region2: #{tpu_custom_call.1} parent=1 // pred_check
      _
    $region3: #{tpu_custom_call.1} parent=1 // pred_check_branch
      %14 = sbr.rel (0) target = $region5
    $region4: #{tpu_custom_call.1} parent=1 // pred_region
      %16 = vsyncadd [#allocation4], 0
      %s17 = sshll.u32 %s0, 4
      %s18 = int_to_ptr.hbm [resolvable:$true] %s17
      %s19 = sshll.u32 [#allocation3], 4
      %s20 = int_to_ptr.vmem [resolvable:$true] %s19
      %25 = dma.hbm_to_vmem [thread:$0]  %s18, 256, %s20, [#allocation4], 128, 128, 8
    $region5: #{tpu_custom_call.1} parent=1 // pred_fallthru
      _
    // Predicated region
    $region6: #{tpu_custom_call.1} parent=1 // pred_check
      _
    $region7: #{tpu_custom_call.1} parent=1 // pred_check_branch
      %27 = sbr.rel (0) target = $region9
    $region8: #{tpu_custom_call.1} parent=1 // pred_region
      %29 = vsyncadd [#allocation7], 0
      %s30 = sshll.u32 %s1, 4
      %s31 = int_to_ptr.hbm [resolvable:$true] %s30
      %s32 = sshll.u32 [#allocation6], 4
      %s33 = int_to_ptr.vmem [resolvable:$true] %s32
      %38 = dma.hbm_to_vmem [thread:$0]  %s31, 2048, %s33, [#allocation7], 128, 128, 8
    $region9: #{tpu_custom_call.1} parent=1 // pred_fallthru
      _
    // Predicated region
    $region10: #{tpu_custom_call.1} parent=1 // pred_check
      _
    $region11: #{tpu_custom_call.1} parent=1 // pred_check_branch
      %40 = sbr.rel (0) target = $region13
    $region12: #{tpu_custom_call.1} parent=1 // pred_region
      _
    $region13: #{tpu_custom_call.1} parent=1 // pred_fallthru
      _
    // Predicated region
    $region14: #{tpu_custom_call.1} parent=1 // pred_check
      _
    $region15: #{tpu_custom_call.1} parent=1 // pred_check_branch
      %42 = sbr.rel (0) target = $region17
    $region16: #{tpu_custom_call.1} parent=1 // pred_region
      %44 = vsyncadd [#allocation7], 0
      %s45 = sshll.u32 %s3, 4
      %s46 = int_to_ptr.hbm [resolvable:$true] %s45
      %s47 = sshll.u32 [#allocation8], 4
      %s48 = int_to_ptr.vmem [resolvable:$true] %s47
      %53 = dma.hbm_to_vmem [thread:$0]  %s46, 2048, %s48, [#allocation7], 128, 128, 8
    $region17: #{tpu_custom_call.1} parent=1 // pred_fallthru
      _
    // Predicated region
    $region18: #{tpu_custom_call.1} parent=1 // pred_check
      _
    $region19: #{tpu_custom_call.1} parent=1 // pred_check_branch
      %55 = sbr.rel (0) target = $region21
    $region20: #{tpu_custom_call.1} parent=1 // pred_region
      _
    $region21: #{tpu_custom_call.1} parent=1 // pred_fallthru
      _
    // Predicated region
    $region22: #{tpu_custom_call.1} parent=1 // pred_check
      _
    $region23: #{tpu_custom_call.1} parent=1 // pred_check_branch
      %57 = sbr.rel (0) target = $region25
    $region24: #{tpu_custom_call.1} parent=1 // pred_region
      %59 = dma.done [#allocation4], 256
    $region25: #{tpu_custom_call.1} parent=1 // pred_fallthru
      _
    // Predicated region
    $region26: #{tpu_custom_call.1} parent=1 // pred_check
      _
    $region27: #{tpu_custom_call.1} parent=1 // pred_check_branch
      %61 = sbr.rel (0) target = $region29
    $region28: #{tpu_custom_call.1} parent=1 // pred_region
      %63 = dma.done [#allocation7], 2048
    $region29: #{tpu_custom_call.1} parent=1 // pred_fallthru
      _
    // Predicated region
    $region30: #{tpu_custom_call.1} parent=1 // pred_check
      _
    $region31: #{tpu_custom_call.1} parent=1 // pred_check_branch
      %65 = sbr.rel (0) target = $region33
    $region32: #{tpu_custom_call.1} parent=1 // pred_region
      %67 = dma.done [#allocation7], 2048
    $region33: #{tpu_custom_call.1} parent=1 // pred_fallthru
      _
    %p68 = scmp.eq.s32.totalorder 0, 0
    // Predicated region
    $region34: #{tpu_custom_call.1} parent=1 // pred_check
      %p69 = pneg %p68
    $region35: #{tpu_custom_call.1} parent=1 // pred_check_branch
      %71 = sbr.rel (%p69) target = $region37
    $region36: #{tpu_custom_call.1} parent=1 // pred_region
      %v72 = vld [vmem:[%s4] sm:$0x1]
      %v74 = vperm.slane %v72, 0
      %76 = vst [vmem:[#allocation2] sm:$0xff] %v74
      %77 = vst [vmem:[#allocation2 + $0x8] sm:$0xff] %v74
    $region37: #{tpu_custom_call.1} parent=1 // pred_fallthru
      _
    %v78 = vld [vmem:[#allocation3] sm:$0xff]
    %v79 = vld [vmem:[#allocation3 + $0x8] sm:$0xff]
    %v80 = vld [vmem:[#allocation6] sm:$0xff]
    %v81 = vld [vmem:[#allocation6 + $0x8] sm:$0xff]
    %v82 = vld [vmem:[#allocation6 + $0x10] sm:$0xff]
    %v83 = vld [vmem:[#allocation6 + $0x18] sm:$0xff]
    %v84 = vld [vmem:[#allocation6 + $0x20] sm:$0xff]
    %v85 = vld [vmem:[#allocation6 + $0x28] sm:$0xff]
    %v86 = vld [vmem:[#allocation6 + $0x30] sm:$0xff]
    %v87 = vld [vmem:[#allocation6 + $0x38] sm:$0xff]
    %v88 = vld [vmem:[#allocation6 + $0x40] sm:$0xff]
    %v89 = vld [vmem:[#allocation6 + $0x48] sm:$0xff]
    %v90 = vld [vmem:[#allocation6 + $0x50] sm:$0xff]
    %v91 = vld [vmem:[#allocation6 + $0x58] sm:$0xff]
    %v92 = vld [vmem:[#allocation6 + $0x60] sm:$0xff]
    %v93 = vld [vmem:[#allocation6 + $0x68] sm:$0xff]
    %v94 = vld [vmem:[#allocation6 + $0x70] sm:$0xff]
    %v95 = vld [vmem:[#allocation6 + $0x78] sm:$0xff]
    %v96 = vld [vmem:[%s2] sm:$0x1]
    %v98 = vperm.slane %v96, 0
    %100 = vmatpush.msra.mxu0 %v95
    %101 = vmatpush.msra.mxu0 %v94
    %102 = vmatpush.msra.mxu0 %v93
    %103 = vmatpush.msra.mxu0 %v92
    %104 = vmatpush.msra.mxu0 %v91
    %105 = vmatpush.msra.mxu0 %v90
    %106 = vmatpush.msra.mxu0 %v89
    %107 = vmatpush.msra.mxu0 %v88
    %108 = vmatpush.msra.mxu0 %v87
    %109 = vmatpush.msra.mxu0 %v86
    %110 = vmatpush.msra.mxu0 %v85
    %111 = vmatpush.msra.mxu0 %v84
    %112 = vmatpush.msra.mxu0 %v83
    %113 = vmatpush.msra.mxu0 %v82
    %114 = vmatpush.msra.mxu0 %v81
    %115 = vmatpush.msra.mxu0 %v80
    %116 = vmatmul.f32.gmra.mxu0 %v78
    %v117 = vpop.f32.mrf.mxu0
    %v118 = vadd.f32 %v98, %v117
    %119 = vmatmul.f32.gmra.mxu0 %v79
    %v120 = vpop.f32.mrf.mxu0
    %v121 = vadd.f32 %v98, %v120
    %122 = vdwg.mxu0
    %v123 = vmax.f32 %v118, 0.0
    %v124 = vmax.f32 %v121, 0.0
    %v125 = vld [vmem:[#allocation2] sm:$0xff]
    %v126 = vld [vmem:[#allocation2 + $0x8] sm:$0xff]
    %v127 = vld [vmem:[#allocation8] sm:$0xff]
    %v128 = vld [vmem:[#allocation8 + $0x8] sm:$0xff]
    %v129 = vld [vmem:[#allocation8 + $0x10] sm:$0xff]
    %v130 = vld [vmem:[#allocation8 + $0x18] sm:$0xff]
    %v131 = vld [vmem:[#allocation8 + $0x20] sm:$0xff]
    %v132 = vld [vmem:[#allocation8 + $0x28] sm:$0xff]
    %v133 = vld [vmem:[#allocation8 + $0x30] sm:$0xff]
    %v134 = vld [vmem:[#allocation8 + $0x38] sm:$0xff]
    %v135 = vld [vmem:[#allocation8 + $0x40] sm:$0xff]
    %v136 = vld [vmem:[#allocation8 + $0x48] sm:$0xff]
    %v137 = vld [vmem:[#allocation8 + $0x50] sm:$0xff]
    %v138 = vld [vmem:[#allocation8 + $0x58] sm:$0xff]
    %v139 = vld [vmem:[#allocation8 + $0x60] sm:$0xff]
    %v140 = vld [vmem:[#allocation8 + $0x68] sm:$0xff]
    %v141 = vld [vmem:[#allocation8 + $0x70] sm:$0xff]
    %v142 = vld [vmem:[#allocation8 + $0x78] sm:$0xff]
    %143 = vmatpush.msra.mxu0 %v142
    %144 = vmatpush.msra.mxu0 %v141
    %145 = vmatpush.msra.mxu0 %v140
    %146 = vmatpush.msra.mxu0 %v139
    %147 = vmatpush.msra.mxu0 %v138
    %148 = vmatpush.msra.mxu0 %v137
    %149 = vmatpush.msra.mxu0 %v136
    %150 = vmatpush.msra.mxu0 %v135
    %151 = vmatpush.msra.mxu0 %v134
    %152 = vmatpush.msra.mxu0 %v133
    %153 = vmatpush.msra.mxu0 %v132
    %154 = vmatpush.msra.mxu0 %v131
    %155 = vmatpush.msra.mxu0 %v130
    %156 = vmatpush.msra.mxu0 %v129
    %157 = vmatpush.msra.mxu0 %v128
    %158 = vmatpush.msra.mxu0 %v127
    %159 = vmatmul.f32.gmra.mxu0 %v123
    %v160 = vpop.f32.mrf.mxu0
    %v161 = vadd.f32 0.0, %v160
    %162 = vmatmul.f32.gmra.mxu0 %v124
    %v163 = vpop.f32.mrf.mxu0
    %v164 = vadd.f32 0.0, %v163
    %165 = vdwg.mxu0
    %v166 = vadd.f32 %v125, %v161
    %v167 = vadd.f32 %v126, %v164
    %168 = vst [vmem:[#allocation2] sm:$0xff] %v166
    %169 = vst [vmem:[#allocation2 + $0x8] sm:$0xff] %v167
    // Predicated region
    $region38: #{tpu_custom_call.1} parent=1 // pred_check
      %p170 = pneg %p68
    $region39: #{tpu_custom_call.1} parent=1 // pred_check_branch
      %172 = sbr.rel (%p170) target = $region41
    $region40: #{tpu_custom_call.1} parent=1 // pred_region
      %v173 = vld [vmem:[#allocation2] sm:$0xff]
      %v174 = vld [vmem:[#allocation2 + $0x8] sm:$0xff]
      %175 = vst [vmem:[#allocation9] sm:$0xff] %v173
      %176 = vst [vmem:[#allocation9 + $0x8] sm:$0xff] %v174
    $region41: #{tpu_custom_call.1} parent=1 // pred_fallthru
      _
    // Predicated region
    $region42: #{tpu_custom_call.1} parent=1 // pred_check
      _
    $region43: #{tpu_custom_call.1} parent=1 // pred_check_branch
      %178 = sbr.rel (0) target = $region45
    $region44: #{tpu_custom_call.1} parent=1 // pred_region
      %180 = vsyncadd [#allocation5], 0
      %s181 = sshll.u32 [#allocation9], 4
      %s182 = int_to_ptr.vmem [resolvable:$true] %s181
      %s183 = sshll.u32 %s5, 4
      %s184 = int_to_ptr.hbm [resolvable:$true] %s183
      %189 = dma.vmem_to_hbm [thread:$0]  %s182, 256, %s184, [#allocation5], 128, 128, 8
    $region45: #{tpu_custom_call.1} parent=1 // pred_fallthru
      _
    // Predicated region
    $region46: #{tpu_custom_call.1} parent=1 // pred_check
      _
    $region47: #{tpu_custom_call.1} parent=1 // pred_check_branch
      %191 = sbr.rel (0) target = $region49
    $region48: #{tpu_custom_call.1} parent=1 // pred_region
      %193 = dma.done [#allocation5], 256
    $region49: #{tpu_custom_call.1} parent=1 // pred_fallthru
      _
    %194 = vsyncpa [#allocation4], 1
    %195 = vsyncpa [#allocation7], 1
    %196 = vsyncpa [#allocation5], 1

</llo_original>
